<compile_context>
chip_gen: v7x
topology: tpu7x:2x2x1
jax: 0.10.0
libtpu: 0.0.40
codegen_flags: <defaults>
</compile_context>

<pallas_src>
import functools

import jax
import jax.numpy as jnp
from jax import lax
from jax.experimental import pallas as pl
from jax.experimental.pallas import tpu as pltpu


def _fdsc_kernel(x_ref, wd_ref, wpt_ref, obias_ref, o_ref,
                 *, k1, k2, stride, H2, W2, Wneed):
    """Fused factorized depthwise-separable conv for a block of NB images.

    x_ref     : (NB, Hq, Wq_s, Cin)  pre-padded (and W-subsampled) NHWC input
    wd_ref    : (k1+k2, Cin)         stacked depthwise taps [w1; w2]
    wpt_ref   : (Cout, Cin)          pointwise 1x1 weights, transposed
    obias_ref : (Cout, H2*W2)        all biases folded through the pointwise
                                     conv (b2 + edge-corrected b1 + bp)
    o_ref     : (NB, Cout, H2*W2)    output block (lane-dense, NCHW-ready)
    """
    NB = x_ref.shape[0]
    C = x_ref.shape[-1]
    rs = stride * stride

    xf = x_ref[...].astype(jnp.float32)                 # one upcast of the tile
    wd = wd_ref[...].astype(jnp.float32)                # (k1+k2, C)

    # ---- stage 1: depthwise (k1,1) conv (vertical taps) ----------------------
    # Only the H2 rows the second stage needs; kh offsets index a non-tiled dim.
    def hslice(kh):
        return xf[:, kh: kh + (H2 - 1) * rs + 1: rs, :Wneed, :]
    t = hslice(0) * wd[0][None, None, None, :]
    for kh in range(1, k1):
        t = t + hslice(kh) * wd[kh][None, None, None, :]

    # ---- stage 2: depthwise (1,k2) conv (horizontal taps, sublane shifts) ----
    def wslice(kw):
        return t[:, :, kw: kw + (W2 - 1) * stride + 1: stride, :]
    acc = wslice(0) * wd[k1][None, None, None, :]
    for kw in range(1, k2):
        acc = acc + wslice(kw) * wd[k1 + kw][None, None, None, :]

    # ---- pointwise 1x1 conv ---------------------------------------------------
    # Computed as wp^T . u^T: result (Cout, H2*W2) -> lane-dense stores, already
    # channels-first.  All biases added post-matmul from the tiny folded table.
    mxu_dtype = jnp.bfloat16 if x_ref.dtype == jnp.bfloat16 else jnp.float32
    wpt = wpt_ref[...].astype(mxu_dtype)                 # (Cout, C)
    obias = obias_ref[...].astype(jnp.float32)           # (Cout, H2*W2)
    for nb in range(NB):                                 # NB is small and static
        u2 = acc[nb].reshape(H2 * W2, C).astype(mxu_dtype)   # (M, C)
        y = lax.dot_general(wpt, u2, (((1,), (1,)), ((), ())),
                            preferred_element_type=jnp.float32)
        o_ref[nb] = (y + obias).astype(o_ref.dtype)      # (Cout, H2*W2)


def factorized_dw_sep_conv(x_nchw, w1, b1, w2, b2, wp, bp, *,
                           stride=1, padding=1, interpret=False):
    """Equivalent of FactorizedDepthwiseSeparableConv.forward (NCHW in/out)."""
    N, C, H, W = x_nchw.shape
    k1 = w1.shape[0]
    k2 = w2.shape[0]
    Cout = wp.shape[1]

    # output spatial dims after the two strided depthwise convs (PyTorch rules)
    H1 = (H + 2 * padding - k1) // stride + 1
    W1 = (W - 1) // stride + 1
    H2 = (H1 - 1) // stride + 1
    W2 = (W1 + 2 * padding - k2) // stride + 1
    Wneed = (W2 - 1) * stride + k2            # columns stage 2 reads from stage 1

    f32 = jnp.float32
    # ---- tiny one-time prep (runs in XLA outside the kernel) -----------------
    # stacked depthwise taps
    wd = jnp.concatenate([w1.astype(f32), w2.astype(f32)], axis=0)   # (k1+k2, C)
    # effective bias after both depthwise convs, per output column j:
    #   b2[c] + b1[c] * sum_{kw : tap lands inside the un-padded intermediate} w2[kw, c]
    pos = jnp.arange(W2)[:, None] * stride + jnp.arange(k2)[None, :] - padding
    valid = ((pos >= 0) & (pos < W1)).astype(f32)                     # (W2, k2)
    bias_w = (valid @ w2.astype(f32)) * b1.astype(f32)[None, :] + b2.astype(f32)[None, :]
    # fold through the pointwise conv and tile over rows -> (Cout, H2*W2)
    obias = bp.astype(f32)[:, None] + jnp.transpose(bias_w @ wp.astype(f32))  # (Cout, W2)
    obias_full = jnp.broadcast_to(obias[:, None, :], (Cout, H2, W2)).reshape(Cout, H2 * W2)
    wpt = jnp.transpose(wp)                                           # (Cout, C)

    # pad once in the wrapper (H by `padding`, W by `padding*stride`) so the
    # kernel never builds padded copies; only every stride-th padded column is
    # ever read, so pre-subsample W by `stride` (cuts DMA traffic for stride>1).
    xq = jnp.pad(x_nchw, ((0, 0), (0, 0),
                          (padding, padding),
                          (padding * stride, padding * stride)))
    xq = jnp.transpose(xq, (0, 2, 3, 1))          # NCHW -> NHWC (C on lanes)
    if stride > 1:
        xq = xq[:, :, ::stride, :]
    Hq, Wq_s = xq.shape[1], xq.shape[2]

    # batch block: big enough to amortize per-step grid overhead, small enough
    # to fit VMEM comfortably, and leave >=2 grid steps (v7x megacore) when N>=2.
    esize = jnp.dtype(x_nchw.dtype).itemsize
    per_img = (Hq * Wq_s * C) * (esize + 4) \
        + (H2 * Wneed * C + H2 * W2 * C) * 4 \
        + Cout * H2 * W2 * esize
    nb = max(1, min(N, (8 << 20) // max(per_img, 1)))
    if N >= 2:
        nb = min(nb, max(1, N // 2))
    while N % nb:
        nb -= 1

    kernel = functools.partial(_fdsc_kernel, k1=k1, k2=k2, stride=stride,
                               H2=H2, W2=W2, Wneed=Wneed)
    compiler_params = None if interpret else pltpu.CompilerParams(
        dimension_semantics=("parallel",),
        vmem_limit_bytes=48 * 1024 * 1024)

    out = pl.pallas_call(
        kernel,
        out_shape=jax.ShapeDtypeStruct((N, Cout, H2 * W2), x_nchw.dtype),
        grid=(N // nb,),
        in_specs=[
            pl.BlockSpec((nb, Hq, Wq_s, C), lambda n: (n, 0, 0, 0)),
            pl.BlockSpec((k1 + k2, C), lambda n: (0, 0)),
            pl.BlockSpec((Cout, C), lambda n: (0, 0)),
            pl.BlockSpec((Cout, H2 * W2), lambda n: (0, 0)),
        ],
        out_specs=pl.BlockSpec((nb, Cout, H2 * W2), lambda n: (n, 0, 0)),
        compiler_params=compiler_params,
        interpret=interpret,
    )(xq, wd, wpt, obias_full)

    return out.reshape(N, Cout, H2, W2)           # already NCHW: no transpose


def _reference(x, w1, b1, w2, b2, wp, bp, *, stride, padding):
    """Pure-JAX reference matching the three nn.Conv2d calls."""
    C = x.shape[1]
    Cout = wp.shape[1]
    dn = ("NCHW", "OIHW", "NCHW")
    wk1 = jnp.transpose(w1)[:, None, :, None]            # (C,1,k1,1)
    y = lax.conv_general_dilated(x, wk1, (stride, stride),
                                 ((padding, padding), (0, 0)),
                                 dimension_numbers=dn,
                                 feature_group_count=C) + b1.reshape(1, C, 1, 1)
    wk2 = jnp.transpose(w2)[:, None, None, :]            # (C,1,1,k2)
    y = lax.conv_general_dilated(y, wk2, (stride, stride),
                                 ((0, 0), (padding, padding)),
                                 dimension_numbers=dn,
                                 feature_group_count=C) + b2.reshape(1, C, 1, 1)
    wkp = jnp.transpose(wp)[:, :, None, None]            # (Cout,Cin,1,1)
    y = lax.conv_general_dilated(y, wkp, (1, 1), ((0, 0), (0, 0)),
                                 dimension_numbers=dn) + bp.reshape(1, Cout, 1, 1)
    return y


if __name__ == "__main__":
    # small shapes consistent with the module defaults: kernel (3,3), stride 1, padding 1
    N, Cin, Cout, H, W = 2, 4, 8, 16, 16
    k1, k2 = 3, 3

    key = jax.random.PRNGKey(0)
    ks = jax.random.split(key, 7)
    w1 = jax.random.uniform(ks[0], (k1, Cin), jnp.float32, -0.5, 0.5)   # depthwise (k1,1)
    b1 = jax.random.uniform(ks[1], (Cin,), jnp.float32, -0.5, 0.5)
    w2 = jax.random.uniform(ks[2], (k2, Cin), jnp.float32, -0.5, 0.5)   # depthwise (1,k2)
    b2 = jax.random.uniform(ks[3], (Cin,), jnp.float32, -0.5, 0.5)
    wp = jax.random.uniform(ks[4], (Cin, Cout), jnp.float32, -0.5, 0.5)  # pointwise 1x1
    bp = jax.random.uniform(ks[5], (Cout,), jnp.float32, -0.5, 0.5)
    x = jax.random.normal(ks[6], (N, Cin, H, W), jnp.float32)

    # ---- stride=1 / padding=1 (module defaults): compiled Pallas kernel ------
    out = factorized_dw_sep_conv(x, w1, b1, w2, b2, wp, bp, stride=1, padding=1)
    out = jax.block_until_ready(out)
    ref = _reference(x, w1, b1, w2, b2, wp, bp, stride=1, padding=1)
    assert out.shape == ref.shape == (N, Cout, H, W), (out.shape, ref.shape)
    assert jnp.allclose(out, ref, atol=1e-4, rtol=1e-4), "stride=1 mismatch vs conv reference"

    # ---- stride=2 numerics check of the fused formulation ---------------------
    # (interpret mode: validates the strided separable math against the conv
    #  reference; see TODO(synk) above about the on-device strided-slice path.)
    out2 = factorized_dw_sep_conv(x, w1, b1, w2, b2, wp, bp, stride=2, padding=1,
                                  interpret=True)
    out2 = jax.block_until_ready(out2)
    ref2 = _reference(x, w1, b1, w2, b2, wp, bp, stride=2, padding=1)
    assert out2.shape == ref2.shape, (out2.shape, ref2.shape)
    assert jnp.allclose(out2, ref2, atol=1e-4, rtol=1e-4), "stride=2 mismatch vs conv reference"

    print("KERNEL_OK")
</pallas_src>

<mosaic_0001>
module attributes {stable_mosaic.version = 11 : i64} {
  func.func @_fdsc_kernel(%arg0: i32, %arg1: memref<1x18x18x4xf32, #tpu.memory_space<vmem>>, %arg2: memref<6x4xf32, #tpu.memory_space<vmem>>, %arg3: memref<8x4xf32, #tpu.memory_space<vmem>>, %arg4: memref<8x256xf32, #tpu.memory_space<vmem>>, %arg5: memref<1x8x256xf32, #tpu.memory_space<vmem>>) attributes {dimension_semantics = [#tpu.dimension_semantics<parallel>], iteration_bounds = array<i64: 2>, scalar_prefetch = 0 : i64, scratch_operands = 0 : i64, tpu.core_type = #tpu.core_type<tc>, window_params = [{transform_indices = @transform_0, window_bounds = array<i64: 1, 18, 18, 4>}, {pipeline_mode = #tpu.pipeline_mode<synchronous>, transform_indices = @transform_1, window_bounds = array<i64: 6, 4>}, {pipeline_mode = #tpu.pipeline_mode<synchronous>, transform_indices = @transform_2, window_bounds = array<i64: 8, 4>}, {pipeline_mode = #tpu.pipeline_mode<synchronous>, transform_indices = @transform_3, window_bounds = array<i64: 8, 256>}, {transform_indices = @transform_4, window_bounds = array<i64: 1, 8, 256>}]} {
    %c0 = arith.constant 0 : index
    %c0_0 = arith.constant 0 : index
    %c0_1 = arith.constant 0 : index
    %c0_2 = arith.constant 0 : index
    %0 = vector.load %arg1[%c0, %c0_0, %c0_1, %c0_2] : memref<1x18x18x4xf32, #tpu.memory_space<vmem>>, vector<1x18x18x4xf32>
    %c0_3 = arith.constant 0 : index
    %c0_4 = arith.constant 0 : index
    %1 = vector.load %arg2[%c0_3, %c0_4] : memref<6x4xf32, #tpu.memory_space<vmem>>, vector<6x4xf32>
    %2 = vector.extract_strided_slice %0 {offsets = [0, 0, 0, 0], sizes = [1, 16, 18, 4], strides = [1, 1, 1, 1]} : vector<1x18x18x4xf32> to vector<1x16x18x4xf32>
    %3 = vector.extract_strided_slice %1 {offsets = [0, 0], sizes = [1, 4], strides = [1, 1]} : vector<6x4xf32> to vector<1x4xf32>
    %4 = vector.shape_cast %3 : vector<1x4xf32> to vector<4xf32>
    %5 = vector.shape_cast %4 : vector<4xf32> to vector<1x1x1x4xf32>
    %6 = vector.broadcast %5 : vector<1x1x1x4xf32> to vector<1x16x18x4xf32>
    %7 = arith.mulf %2, %6 : vector<1x16x18x4xf32>
    %8 = vector.extract_strided_slice %0 {offsets = [0, 1, 0, 0], sizes = [1, 16, 18, 4], strides = [1, 1, 1, 1]} : vector<1x18x18x4xf32> to vector<1x16x18x4xf32>
    %9 = vector.extract_strided_slice %1 {offsets = [1, 0], sizes = [1, 4], strides = [1, 1]} : vector<6x4xf32> to vector<1x4xf32>
    %10 = vector.shape_cast %9 : vector<1x4xf32> to vector<4xf32>
    %11 = vector.shape_cast %10 : vector<4xf32> to vector<1x1x1x4xf32>
    %12 = vector.broadcast %11 : vector<1x1x1x4xf32> to vector<1x16x18x4xf32>
    %13 = arith.mulf %8, %12 : vector<1x16x18x4xf32>
    %14 = arith.addf %7, %13 : vector<1x16x18x4xf32>
    %15 = vector.extract_strided_slice %0 {offsets = [0, 2, 0, 0], sizes = [1, 16, 18, 4], strides = [1, 1, 1, 1]} : vector<1x18x18x4xf32> to vector<1x16x18x4xf32>
    %16 = vector.extract_strided_slice %1 {offsets = [2, 0], sizes = [1, 4], strides = [1, 1]} : vector<6x4xf32> to vector<1x4xf32>
    %17 = vector.shape_cast %16 : vector<1x4xf32> to vector<4xf32>
    %18 = vector.shape_cast %17 : vector<4xf32> to vector<1x1x1x4xf32>
    %19 = vector.broadcast %18 : vector<1x1x1x4xf32> to vector<1x16x18x4xf32>
    %20 = arith.mulf %15, %19 : vector<1x16x18x4xf32>
    %21 = arith.addf %14, %20 : vector<1x16x18x4xf32>
    %22 = vector.extract_strided_slice %21 {offsets = [0, 0, 0, 0], sizes = [1, 16, 16, 4], strides = [1, 1, 1, 1]} : vector<1x16x18x4xf32> to vector<1x16x16x4xf32>
    %23 = vector.extract_strided_slice %1 {offsets = [3, 0], sizes = [1, 4], strides = [1, 1]} : vector<6x4xf32> to vector<1x4xf32>
    %24 = vector.shape_cast %23 : vector<1x4xf32> to vector<4xf32>
    %25 = vector.shape_cast %24 : vector<4xf32> to vector<1x1x1x4xf32>
    %26 = vector.broadcast %25 : vector<1x1x1x4xf32> to vector<1x16x16x4xf32>
    %27 = arith.mulf %22, %26 : vector<1x16x16x4xf32>
    %28 = vector.extract_strided_slice %21 {offsets = [0, 0, 1, 0], sizes = [1, 16, 16, 4], strides = [1, 1, 1, 1]} : vector<1x16x18x4xf32> to vector<1x16x16x4xf32>
    %29 = vector.extract_strided_slice %1 {offsets = [4, 0], sizes = [1, 4], strides = [1, 1]} : vector<6x4xf32> to vector<1x4xf32>
    %30 = vector.shape_cast %29 : vector<1x4xf32> to vector<4xf32>
    %31 = vector.shape_cast %30 : vector<4xf32> to vector<1x1x1x4xf32>
    %32 = vector.broadcast %31 : vector<1x1x1x4xf32> to vector<1x16x16x4xf32>
    %33 = arith.mulf %28, %32 : vector<1x16x16x4xf32>
    %34 = arith.addf %27, %33 : vector<1x16x16x4xf32>
    %35 = vector.extract_strided_slice %21 {offsets = [0, 0, 2, 0], sizes = [1, 16, 16, 4], strides = [1, 1, 1, 1]} : vector<1x16x18x4xf32> to vector<1x16x16x4xf32>
    %36 = vector.extract_strided_slice %1 {offsets = [5, 0], sizes = [1, 4], strides = [1, 1]} : vector<6x4xf32> to vector<1x4xf32>
    %37 = vector.shape_cast %36 : vector<1x4xf32> to vector<4xf32>
    %38 = vector.shape_cast %37 : vector<4xf32> to vector<1x1x1x4xf32>
    %39 = vector.broadcast %38 : vector<1x1x1x4xf32> to vector<1x16x16x4xf32>
    %40 = arith.mulf %35, %39 : vector<1x16x16x4xf32>
    %41 = arith.addf %34, %40 : vector<1x16x16x4xf32>
    %c0_5 = arith.constant 0 : index
    %c0_6 = arith.constant 0 : index
    %42 = vector.load %arg3[%c0_5, %c0_6] : memref<8x4xf32, #tpu.memory_space<vmem>>, vector<8x4xf32>
    %c0_7 = arith.constant 0 : index
    %c0_8 = arith.constant 0 : index
    %43 = vector.load %arg4[%c0_7, %c0_8] : memref<8x256xf32, #tpu.memory_space<vmem>>, vector<8x256xf32>
    %44 = vector.shape_cast %41 : vector<1x16x16x4xf32> to vector<16x16x4xf32>
    %45 = vector.shape_cast %44 : vector<16x16x4xf32> to vector<256x4xf32>
    %cst = arith.constant dense<0.000000e+00> : vector<8x256xf32>
    %46 = tpu.matmul %42, %45, %cst {dimension_numbers = #tpu.dot_dimension_numbers<[1], [1], [0], [0], [0, 0, 1, 0], [], []>} : vector<8x4xf32>, vector<256x4xf32>, vector<8x256xf32> -> vector<8x256xf32>
    %47 = arith.addf %46, %43 : vector<8x256xf32>
    %c0_9 = arith.constant 0 : index
    %c0_10 = arith.constant 0 : index
    %c0_11 = arith.constant 0 : index
    %48 = vector.load %arg5[%c0_9, %c0_10, %c0_11] : memref<1x8x256xf32, #tpu.memory_space<vmem>>, vector<1x8x256xf32>
    %49 = vector.shape_cast %48 : vector<1x8x256xf32> to vector<8x256xf32>
    %50 = vector.shape_cast %47 : vector<8x256xf32> to vector<1x8x256xf32>
    tpu.vector_store %arg5[%c0_9, %c0_10, %c0_11], %50 {strides = array<i32>} : memref<1x8x256xf32, #tpu.memory_space<vmem>>, vector<1x8x256xf32>,
    return
  }
  func.func @transform_0(%arg0: i32) -> (i32, i32, i32, i32) {
    %c0_i32 = arith.constant 0 : i32
    %c0_i32_0 = arith.constant 0 : i32
    %c0_i32_1 = arith.constant 0 : i32
    %c0_i32_2 = arith.constant 0 : i32
    return %arg0, %c0_i32, %c0_i32_0, %c0_i32_1 : i32, i32, i32, i32
  }
  func.func @transform_1(%arg0: i32) -> (i32, i32) {
    %c0_i32 = arith.constant 0 : i32
    %c0_i32_0 = arith.constant 0 : i32
    %c0_i32_1 = arith.constant 0 : i32
    return %c0_i32, %c0_i32_0 : i32, i32
  }
  func.func @transform_2(%arg0: i32) -> (i32, i32) {
    %c0_i32 = arith.constant 0 : i32
    %c0_i32_0 = arith.constant 0 : i32
    %c0_i32_1 = arith.constant 0 : i32
    return %c0_i32, %c0_i32_0 : i32, i32
  }
  func.func @transform_3(%arg0: i32) -> (i32, i32) {
    %c0_i32 = arith.constant 0 : i32
    %c0_i32_0 = arith.constant 0 : i32
    %c0_i32_1 = arith.constant 0 : i32
    return %c0_i32, %c0_i32_0 : i32, i32
  }
  func.func @transform_4(%arg0: i32) -> (i32, i32, i32) {
    %c0_i32 = arith.constant 0 : i32
    %c0_i32_0 = arith.constant 0 : i32
    %c0_i32_1 = arith.constant 0 : i32
    return %arg0, %c0_i32, %c0_i32_0 : i32, i32, i32
  }
}

</mosaic_0001>

<llo_original>
// kernel: tpu_custom_call.1
$region0: #{tpu_custom_call.1}
  #allocation0 [shape = 'u32[]', space=smem, size = 0x4, offset = 0x4, fixed_abs, tag = 'smem constant byte address 0x4 - core index']
  #allocation1 [shape = 'u32[144,128]{1,0:T(1,128)}', space=vmem, size = 0x12000, scoped, tag = 'internal scratch']
  %s0 = inlined_call_operand.vmem [shape: f32[2,18,18,4], index: 0, kind: input, shape index: {}]
  %s1 = inlined_call_operand.vmem [shape: f32[6,4], index: 1, kind: input, shape index: {}]
  %s2 = inlined_call_operand.vmem [shape: f32[8,4], index: 2, kind: input, shape index: {}]
  %s3 = inlined_call_operand.vmem [shape: f32[8,256], index: 3, kind: input, shape index: {}]
  %s4 = inlined_call_operand.hbm [shape: f32[2,8,256], index: 4, kind: output, shape index: {}]
  %s5 = sld [smem:[#allocation0]]
  $region49: #{tpu_custom_call.1} parent=0
    _
  %s7 = ssub.s32 1, %s5
  %s8 = scalar_select 0, %s7, %s5
  $region1: #{tpu_custom_call.1} parent=0
    #allocation2 [shape = 'u8[16384]{0}', space=vmem, size = 0x4000, scoped, tag = 'output window, operand 0']
    #allocation3 [shape = 's32[2]{0}', space=sflag, size = 0x8, scoped, tag = 'scoped memory for tpu_custom_call.1']
    %9 = vsyncpa [#allocation3], 0
    %s10 = scalar_lea.sflag [#allocation3], 1
    %11 = vsyncpa %s10, 0
    loop: start=0, step=1, limit=4
    $region2: #{tpu_custom_call.1} parent=1 // loop_pre_header
      _
    $region3: #{tpu_custom_call.1} parent=1 // loop_header
      %s13 = sphi 0, %s17
      %p14 = scmp.ge.s32.totalorder %s13, 4
      %s23 = sphi 0, %s25
      %s26 = sphi 0, %s23
      %s27 = sphi 0, %s26
      %s43 = sphi 0, %s27
      %s47 = sphi 0, %s47
      %s49 = sphi 0, %s47
      %s50 = sphi 0, %s49
      %s64 = sphi 0, %s50
      %s68 = sphi 0, %s68
      %s70 = sphi 0, %s68
      %s71 = sphi 0, %s70
      %s85 = sphi 0, %s71
      %s89 = sphi 0, %s89
      %s91 = sphi 0, %s89
      %s92 = sphi 0, %s91
      %s106 = sphi 0, %s92
      %s112 = sphi 0, %s114
      %s115 = sphi 0, %s112
      %s116 = sphi 0, %s115
      %s132 = sphi 0, %s116
    $region4: #{tpu_custom_call.1} parent=1 // loop_header_branch
      %16 = sbr.rel (%p14) target = $region8
    $region5: #{tpu_custom_call.1} parent=1 // loop_body
      %s18 = ssub.s32 %s13, 1
      %s19 = ssub.s32 %s13, 2
      %s20 = sadd.s32 %s13, 1
      %s21 = ssub.s32 %s13, %s20
      %p22 = scmp.eq.s32.totalorder %s21, 0
      %s24 = sadd.s32 %s23, 1
      %s25 = scalar_select %p22, %s23, %s24
      %p28 = pneg %p22
      %p29 = scmp.eq.s32.totalorder %s13, 1
      %p30 = por %p28, %p29
      %p31 = scmp.ne.s32.totalorder %s23, %s26
      %p32 = scmp.eq.s32.totalorder %s13, 0
      %p33 = por %p31, %p32
      %p34 = scmp.ne.s32.totalorder %s23, %s26
      %p35 = scmp.eq.s32.totalorder %s18, 1
      %p36 = por %p34, %p35
      %p37 = scmp.ne.s32.totalorder %s26, %s27
      %p38 = scmp.eq.s32.totalorder %s18, 0
      %p39 = por %p37, %p38
      %p40 = scmp.ne.s32.totalorder %s26, %s27
      %p41 = scmp.eq.s32.totalorder %s19, 1
      %p42 = por %p40, %p41
      %p44 = scmp.ne.s32.totalorder %s27, %s43
      %p45 = scmp.eq.s32.totalorder %s19, 0
      %p46 = por %p44, %p45
      %s48 = sadd.s32 %s47, 1
      %p51 = scmp.eq.s32.totalorder %s13, 1
      %p52 = scmp.ne.s32.totalorder %s47, %s49
      %p53 = scmp.eq.s32.totalorder %s13, 0
      %p54 = por %p52, %p53
      %p55 = scmp.ne.s32.totalorder %s47, %s49
      %p56 = scmp.eq.s32.totalorder %s18, 1
      %p57 = por %p55, %p56
      %p58 = scmp.ne.s32.totalorder %s49, %s50
      %p59 = scmp.eq.s32.totalorder %s18, 0
      %p60 = por %p58, %p59
      %p61 = scmp.ne.s32.totalorder %s49, %s50
      %p62 = scmp.eq.s32.totalorder %s19, 1
      %p63 = por %p61, %p62
      %p65 = scmp.ne.s32.totalorder %s50, %s64
      %p66 = scmp.eq.s32.totalorder %s19, 0
      %p67 = por %p65, %p66
      %s69 = sadd.s32 %s68, 1
      %p72 = scmp.eq.s32.totalorder %s13, 1
      %p73 = scmp.ne.s32.totalorder %s68, %s70
      %p74 = scmp.eq.s32.totalorder %s13, 0
      %p75 = por %p73, %p74
      %p76 = scmp.ne.s32.totalorder %s68, %s70
      %p77 = scmp.eq.s32.totalorder %s18, 1
      %p78 = por %p76, %p77
      %p79 = scmp.ne.s32.totalorder %s70, %s71
      %p80 = scmp.eq.s32.totalorder %s18, 0
      %p81 = por %p79, %p80
      %p82 = scmp.ne.s32.totalorder %s70, %s71
      %p83 = scmp.eq.s32.totalorder %s19, 1
      %p84 = por %p82, %p83
      %p86 = scmp.ne.s32.totalorder %s71, %s85
      %p87 = scmp.eq.s32.totalorder %s19, 0
      %p88 = por %p86, %p87
      %s90 = sadd.s32 %s89, 1
      %p93 = scmp.eq.s32.totalorder %s13, 1
      %p94 = scmp.ne.s32.totalorder %s89, %s91
      %p95 = scmp.eq.s32.totalorder %s13, 0
      %p96 = por %p94, %p95
      %p97 = scmp.ne.s32.totalorder %s89, %s91
      %p98 = scmp.eq.s32.totalorder %s18, 1
      %p99 = por %p97, %p98
      %p100 = scmp.ne.s32.totalorder %s91, %s92
      %p101 = scmp.eq.s32.totalorder %s18, 0
      %p102 = por %p100, %p101
      %p103 = scmp.ne.s32.totalorder %s91, %s92
      %p104 = scmp.eq.s32.totalorder %s19, 1
      %p105 = por %p103, %p104
      %p107 = scmp.ne.s32.totalorder %s92, %s106
      %p108 = scmp.eq.s32.totalorder %s19, 0
      %p109 = por %p107, %p108
      %s110 = ssub.s32 %s13, %s20
      %p111 = scmp.eq.s32.totalorder %s110, 0
      %s113 = sadd.s32 %s112, 1
      %s114 = scalar_select %p111, %s112, %s113
      %p117 = pneg %p111
      %p118 = scmp.eq.s32.totalorder %s13, 1
      %p119 = por %p117, %p118
      %p120 = scmp.ne.s32.totalorder %s112, %s115
      %p121 = scmp.eq.s32.totalorder %s13, 0
      %p122 = por %p120, %p121
      %p123 = scmp.ne.s32.totalorder %s112, %s115
      %p124 = scmp.eq.s32.totalorder %s18, 1
      %p125 = por %p123, %p124
      %p126 = scmp.ne.s32.totalorder %s115, %s116
      %p127 = scmp.eq.s32.totalorder %s18, 0
      %p128 = por %p126, %p127
      %p129 = scmp.ne.s32.totalorder %s115, %s116
      %p130 = scmp.eq.s32.totalorder %s19, 1
      %p131 = por %p129, %p130
      %p133 = scmp.ne.s32.totalorder %s116, %s132
      %p134 = scmp.eq.s32.totalorder %s19, 0
      %p135 = por %p133, %p134
      %p136 = scmp.le.s32.totalorder 1, %s13
      %p137 = scmp.lt.s32.totalorder %s13, 3
      %p138 = pnand %p136, %p137
      %p139 = pneg %p138
      // Predicated region
      $region9: #{tpu_custom_call.1} parent=5 // pred_check
        _
      $region10: #{tpu_custom_call.1} parent=5 // pred_check_branch
        %141 = sbr.rel (%p138) target = $region12
      $region11: #{tpu_custom_call.1} parent=5 // pred_region
        %s142 = ssub.s32 %s13, 1
        // Predicated region
        $region13: #{tpu_custom_call.1} parent=11 // pred_check
          %p143 = pneg %p60
        $region14: #{tpu_custom_call.1} parent=11 // pred_check_branch
          %145 = sbr.rel (%p143) target = $region16
        $region15: #{tpu_custom_call.1} parent=11 // pred_region
          _
        $region16: #{tpu_custom_call.1} parent=11 // pred_fallthru
          _
        // Predicated region
        $region17: #{tpu_custom_call.1} parent=11 // pred_check
          %p146 = pneg %p81
        $region18: #{tpu_custom_call.1} parent=11 // pred_check_branch
          %148 = sbr.rel (%p146) target = $region20
        $region19: #{tpu_custom_call.1} parent=11 // pred_region
          _
        $region20: #{tpu_custom_call.1} parent=11 // pred_fallthru
          _
        // Predicated region
        $region21: #{tpu_custom_call.1} parent=11 // pred_check
          %p149 = pneg %p102
        $region22: #{tpu_custom_call.1} parent=11 // pred_check_branch
          %151 = sbr.rel (%p149) target = $region24
        $region23: #{tpu_custom_call.1} parent=11 // pred_region
          _
        $region24: #{tpu_custom_call.1} parent=11 // pred_fallthru
          _
      $region12: #{tpu_custom_call.1} parent=5 // pred_fallthru
        _
      %p152 = scmp.lt.s32.totalorder %s13, 2
      // Predicated region
      $region25: #{tpu_custom_call.1} parent=5 // pred_check
        %p153 = pneg %p152
      $region26: #{tpu_custom_call.1} parent=5 // pred_check_branch
        %155 = sbr.rel (%p153) target = $region28
      $region27: #{tpu_custom_call.1} parent=5 // pred_region
        // Predicated region
        $region29: #{tpu_custom_call.1} parent=27 // pred_check
          %p156 = pneg %p33
        $region30: #{tpu_custom_call.1} parent=27 // pred_check_branch
          %158 = sbr.rel (%p156) target = $region32
        $region31: #{tpu_custom_call.1} parent=27 // pred_region
          %p159 = scmp.lt.s32.totalorder %s13, 1
          %s160 = scalar_select %p159, %s13, 1
          %s161 = smul.addr %s160, 54
          %s162 = smul.addr %s161, 8
          %s163 = scalar_lea.vmem %s0, %s162
        $region32: #{tpu_custom_call.1} parent=27 // pred_fallthru
          _
      $region28: #{tpu_custom_call.1} parent=5 // pred_fallthru
        _
      %p164 = scmp.le.s32.totalorder 1, %s13
      %p165 = scmp.lt.s32.totalorder %s13, 3
      %p166 = pnand %p164, %p165
      %p167 = pneg %p166
      // Predicated region
      $region33: #{tpu_custom_call.1} parent=5 // pred_check
        _
      $region34: #{tpu_custom_call.1} parent=5 // pred_check_branch
        %169 = sbr.rel (%p166) target = $region36
      $region35: #{tpu_custom_call.1} parent=5 // pred_region
        %s170 = ssub.s32 %s13, 1
        %p171 = scmp.lt.s32.totalorder %s18, 1
        %s172 = scalar_select %p171, %s18, 1
        %s173 = smul.addr %s172, 54
        %s174 = smul.addr %s173, 8
        %s175 = scalar_lea.vmem %s0, %s174
        %p176 = pneg %p39
        %p177 = pneg %p36
        %p178 = pneg %p60
        %p179 = pneg %p57
        %p180 = pneg %p81
        %p181 = pneg %p78
        %p182 = pneg %p102
        %p183 = pneg %p99
        %p184 = pneg %p128
        %p185 = pneg %p125
        %s186 = sand.u32 %s115, 1
        %s187 = scalar_lea.sflag [#allocation3], %s186
        %s188 = sand.u32 %s115, 1
        %s189 = smul.addr %s188, 16
        %s190 = scalar_lea.vmem [#allocation2], %s189
        %p191 = scmp.lt.s32.totalorder %s18, 1
        %s192 = scalar_select %p191, %s18, 1
        %s193 = smul.addr %s192, 54
        %s194 = smul.addr %s193, 8
        %s195 = scalar_lea.vmem %s0, %s194
        %v196 = vld [vmem:[%s195] sm:$0xff]
        %v197 = vld [vmem:[%s195 + $0x8] sm:$0xff]
        %v198 = vld [vmem:[%s195 + $0x10] sm:$0x3]
        %v199 = vld [vmem:[%s195 + $0x18] sm:$0xff]
        %v200 = vld [vmem:[%s195 + $0x20] sm:$0xff]
        %v201 = vld [vmem:[%s195 + $0x28] sm:$0x3]
        %v202 = vld [vmem:[%s195 + $0x30] sm:$0xff]
        %v203 = vld [vmem:[%s195 + $0x38] sm:$0xff]
        %v204 = vld [vmem:[%s195 + $0x40] sm:$0x3]
        %v205 = vld [vmem:[%s195 + $0x48] sm:$0xff]
        %v206 = vld [vmem:[%s195 + $0x50] sm:$0xff]
        %v207 = vld [vmem:[%s195 + $0x58] sm:$0x3]
        %v208 = vld [vmem:[%s195 + $0x60] sm:$0xff]
        %v209 = vld [vmem:[%s195 + $0x68] sm:$0xff]
        %v210 = vld [vmem:[%s195 + $0x70] sm:$0x3]
        %v211 = vld [vmem:[%s195 + $0x78] sm:$0xff]
        %v212 = vld [vmem:[%s195 + $0x80] sm:$0xff]
        %v213 = vld [vmem:[%s195 + $0x88] sm:$0x3]
        %v214 = vld [vmem:[%s195 + $0x90] sm:$0xff]
        %v215 = vld [vmem:[%s195 + $0x98] sm:$0xff]
        %v216 = vld [vmem:[%s195 + $0xa0] sm:$0x3]
        %v217 = vld [vmem:[%s195 + $0xa8] sm:$0xff]
        %v218 = vld [vmem:[%s195 + $0xb0] sm:$0xff]
        %v219 = vld [vmem:[%s195 + $0xb8] sm:$0x3]
        %v220 = vld [vmem:[%s195 + $0xc0] sm:$0xff]
        %v221 = vld [vmem:[%s195 + $0xc8] sm:$0xff]
        %v222 = vld [vmem:[%s195 + $0xd0] sm:$0x3]
        %v223 = vld [vmem:[%s195 + $0xd8] sm:$0xff]
        %v224 = vld [vmem:[%s195 + $0xe0] sm:$0xff]
        %v225 = vld [vmem:[%s195 + $0xe8] sm:$0x3]
        %v226 = vld [vmem:[%s195 + $0xf0] sm:$0xff]
        %v227 = vld [vmem:[%s195 + $0xf8] sm:$0xff]
        %v228 = vld [vmem:[%s195 + $0x100] sm:$0x3]
        %v229 = vld [vmem:[%s195 + $0x108] sm:$0xff]
        %v230 = vld [vmem:[%s195 + $0x110] sm:$0xff]
        %v231 = vld [vmem:[%s195 + $0x118] sm:$0x3]
        %v232 = vld [vmem:[%s195 + $0x120] sm:$0xff]
        %v233 = vld [vmem:[%s195 + $0x128] sm:$0xff]
        %v234 = vld [vmem:[%s195 + $0x130] sm:$0x3]
        %v235 = vld [vmem:[%s195 + $0x138] sm:$0xff]
        %v236 = vld [vmem:[%s195 + $0x140] sm:$0xff]
        %v237 = vld [vmem:[%s195 + $0x148] sm:$0x3]
        %v238 = vld [vmem:[%s195 + $0x150] sm:$0xff]
        %v239 = vld [vmem:[%s195 + $0x158] sm:$0xff]
        %v240 = vld [vmem:[%s195 + $0x160] sm:$0x3]
        %v241 = vld [vmem:[%s195 + $0x168] sm:$0xff]
        %v242 = vld [vmem:[%s195 + $0x170] sm:$0xff]
        %v243 = vld [vmem:[%s195 + $0x178] sm:$0x3]
        %v244 = vld [vmem:[%s195 + $0x180] sm:$0xff]
        %v245 = vld [vmem:[%s195 + $0x188] sm:$0xff]
        %v246 = vld [vmem:[%s195 + $0x190] sm:$0x3]
        %v247 = vld [vmem:[%s195 + $0x198] sm:$0xff]
        %v248 = vld [vmem:[%s195 + $0x1a0] sm:$0xff]
        %v249 = vld [vmem:[%s195 + $0x1a8] sm:$0x3]
        %v250 = vld [vmem:[%s1] sm:$0x3f]
        %v251 = vlaneseq
        %v252 = vshrl.u32 %v251, 7
        %v253 = vsub.s32 0, %v252
        %v254 = vrot.slane %v250, %v253
        %v255 = vmul.f32 %v196, %v254
        %v256 = vmul.f32 %v197, %v254
        %v257 = vmul.f32 %v198, %v254
        %v258 = vmul.f32 %v199, %v254
        %v259 = vmul.f32 %v200, %v254
        %v260 = vmul.f32 %v201, %v254
        %v261 = vmul.f32 %v202, %v254
        %v262 = vmul.f32 %v203, %v254
        %v263 = vmul.f32 %v204, %v254
        %v264 = vmul.f32 %v205, %v254
        %v265 = vmul.f32 %v206, %v254
        %v266 = vmul.f32 %v207, %v254
        %v267 = vmul.f32 %v208, %v254
        %v268 = vmul.f32 %v209, %v254
        %v269 = vmul.f32 %v210, %v254
        %v270 = vmul.f32 %v211, %v254
        %v271 = vmul.f32 %v212, %v254
        %v272 = vmul.f32 %v213, %v254
        %v273 = vmul.f32 %v214, %v254
        %v274 = vmul.f32 %v215, %v254
        %v275 = vmul.f32 %v216, %v254
        %v276 = vmul.f32 %v217, %v254
        %v277 = vmul.f32 %v218, %v254
        %v278 = vmul.f32 %v219, %v254
        %v279 = vmul.f32 %v220, %v254
        %v280 = vmul.f32 %v221, %v254
        %v281 = vmul.f32 %v222, %v254
        %v282 = vmul.f32 %v223, %v254
        %v283 = vmul.f32 %v224, %v254
        %v284 = vmul.f32 %v225, %v254
        %v285 = vmul.f32 %v226, %v254
        %v286 = vmul.f32 %v227, %v254
        %v287 = vmul.f32 %v228, %v254
        %v288 = vmul.f32 %v229, %v254
        %v289 = vmul.f32 %v230, %v254
        %v290 = vmul.f32 %v231, %v254
        %v291 = vmul.f32 %v232, %v254
        %v292 = vmul.f32 %v233, %v254
        %v293 = vmul.f32 %v234, %v254
        %v294 = vmul.f32 %v235, %v254
        %v295 = vmul.f32 %v236, %v254
        %v296 = vmul.f32 %v237, %v254
        %v297 = vmul.f32 %v238, %v254
        %v298 = vmul.f32 %v239, %v254
        %v299 = vmul.f32 %v240, %v254
        %v300 = vmul.f32 %v241, %v254
        %v301 = vmul.f32 %v242, %v254
        %v302 = vmul.f32 %v243, %v254
        %v303 = vlaneseq
        %v304 = vshrl.u32 %v303, 7
        %v305 = vsub.s32 1, %v304
        %v306 = vrot.slane %v250, %v305
        %v307 = vmul.f32 %v199, %v306
        %v308 = vmul.f32 %v200, %v306
        %v309 = vmul.f32 %v201, %v306
        %v310 = vmul.f32 %v202, %v306
        %v311 = vmul.f32 %v203, %v306
        %v312 = vmul.f32 %v204, %v306
        %v313 = vmul.f32 %v205, %v306
        %v314 = vmul.f32 %v206, %v306
        %v315 = vmul.f32 %v207, %v306
        %v316 = vmul.f32 %v208, %v306
        %v317 = vmul.f32 %v209, %v306
        %v318 = vmul.f32 %v210, %v306
        %v319 = vmul.f32 %v211, %v306
        %v320 = vmul.f32 %v212, %v306
        %v321 = vmul.f32 %v213, %v306
        %v322 = vmul.f32 %v214, %v306
        %v323 = vmul.f32 %v215, %v306
        %v324 = vmul.f32 %v216, %v306
        %v325 = vmul.f32 %v217, %v306
        %v326 = vmul.f32 %v218, %v306
        %v327 = vmul.f32 %v219, %v306
        %v328 = vmul.f32 %v220, %v306
        %v329 = vmul.f32 %v221, %v306
        %v330 = vmul.f32 %v222, %v306
        %v331 = vmul.f32 %v223, %v306
        %v332 = vmul.f32 %v224, %v306
        %v333 = vmul.f32 %v225, %v306
        %v334 = vmul.f32 %v226, %v306
        %v335 = vmul.f32 %v227, %v306
        %v336 = vmul.f32 %v228, %v306
        %v337 = vmul.f32 %v229, %v306
        %v338 = vmul.f32 %v230, %v306
        %v339 = vmul.f32 %v231, %v306
        %v340 = vmul.f32 %v232, %v306
        %v341 = vmul.f32 %v233, %v306
        %v342 = vmul.f32 %v234, %v306
        %v343 = vmul.f32 %v235, %v306
        %v344 = vmul.f32 %v236, %v306
        %v345 = vmul.f32 %v237, %v306
        %v346 = vmul.f32 %v238, %v306
        %v347 = vmul.f32 %v239, %v306
        %v348 = vmul.f32 %v240, %v306
        %v349 = vmul.f32 %v241, %v306
        %v350 = vmul.f32 %v242, %v306
        %v351 = vmul.f32 %v243, %v306
        %v352 = vmul.f32 %v244, %v306
        %v353 = vmul.f32 %v245, %v306
        %v354 = vmul.f32 %v246, %v306
        %v355 = vadd.f32 %v255, %v307
        %v356 = vadd.f32 %v256, %v308
        %v357 = vadd.f32 %v257, %v309
        %v358 = vadd.f32 %v258, %v310
        %v359 = vadd.f32 %v259, %v311
        %v360 = vadd.f32 %v260, %v312
        %v361 = vadd.f32 %v261, %v313
        %v362 = vadd.f32 %v262, %v314
        %v363 = vadd.f32 %v263, %v315
        %v364 = vadd.f32 %v264, %v316
        %v365 = vadd.f32 %v265, %v317
        %v366 = vadd.f32 %v266, %v318
        %v367 = vadd.f32 %v267, %v319
        %v368 = vadd.f32 %v268, %v320
        %v369 = vadd.f32 %v269, %v321
        %v370 = vadd.f32 %v270, %v322
        %v371 = vadd.f32 %v271, %v323
        %v372 = vadd.f32 %v272, %v324
        %v373 = vadd.f32 %v273, %v325
        %v374 = vadd.f32 %v274, %v326
        %v375 = vadd.f32 %v275, %v327
        %v376 = vadd.f32 %v276, %v328
        %v377 = vadd.f32 %v277, %v329
        %v378 = vadd.f32 %v278, %v330
        %v379 = vadd.f32 %v279, %v331
        %v380 = vadd.f32 %v280, %v332
        %v381 = vadd.f32 %v281, %v333
        %v382 = vadd.f32 %v282, %v334
        %v383 = vadd.f32 %v283, %v335
        %v384 = vadd.f32 %v284, %v336
        %v385 = vadd.f32 %v285, %v337
        %v386 = vadd.f32 %v286, %v338
        %v387 = vadd.f32 %v287, %v339
        %v388 = vadd.f32 %v288, %v340
        %v389 = vadd.f32 %v289, %v341
        %v390 = vadd.f32 %v290, %v342
        %v391 = vadd.f32 %v291, %v343
        %v392 = vadd.f32 %v292, %v344
        %v393 = vadd.f32 %v293, %v345
        %v394 = vadd.f32 %v294, %v346
        %v395 = vadd.f32 %v295, %v347
        %v396 = vadd.f32 %v296, %v348
        %v397 = vadd.f32 %v297, %v349
        %v398 = vadd.f32 %v298, %v350
        %v399 = vadd.f32 %v299, %v351
        %v400 = vadd.f32 %v300, %v352
        %v401 = vadd.f32 %v301, %v353
        %v402 = vadd.f32 %v302, %v354
        %v403 = vlaneseq
        %v404 = vshrl.u32 %v403, 7
        %v405 = vsub.s32 2, %v404
        %v406 = vrot.slane %v250, %v405
        %v407 = vmul.f32 %v202, %v406
        %v408 = vmul.f32 %v203, %v406
        %v409 = vmul.f32 %v204, %v406
        %v410 = vmul.f32 %v205, %v406
        %v411 = vmul.f32 %v206, %v406
        %v412 = vmul.f32 %v207, %v406
        %v413 = vmul.f32 %v208, %v406
        %v414 = vmul.f32 %v209, %v406
        %v415 = vmul.f32 %v210, %v406
        %v416 = vmul.f32 %v211, %v406
        %v417 = vmul.f32 %v212, %v406
        %v418 = vmul.f32 %v213, %v406
        %v419 = vmul.f32 %v214, %v406
        %v420 = vmul.f32 %v215, %v406
        %v421 = vmul.f32 %v216, %v406
        %v422 = vmul.f32 %v217, %v406
        %v423 = vmul.f32 %v218, %v406
        %v424 = vmul.f32 %v219, %v406
        %v425 = vmul.f32 %v220, %v406
        %v426 = vmul.f32 %v221, %v406
        %v427 = vmul.f32 %v222, %v406
        %v428 = vmul.f32 %v223, %v406
        %v429 = vmul.f32 %v224, %v406
        %v430 = vmul.f32 %v225, %v406
        %v431 = vmul.f32 %v226, %v406
        %v432 = vmul.f32 %v227, %v406
        %v433 = vmul.f32 %v228, %v406
        %v434 = vmul.f32 %v229, %v406
        %v435 = vmul.f32 %v230, %v406
        %v436 = vmul.f32 %v231, %v406
        %v437 = vmul.f32 %v232, %v406
        %v438 = vmul.f32 %v233, %v406
        %v439 = vmul.f32 %v234, %v406
        %v440 = vmul.f32 %v235, %v406
        %v441 = vmul.f32 %v236, %v406
        %v442 = vmul.f32 %v237, %v406
        %v443 = vmul.f32 %v238, %v406
        %v444 = vmul.f32 %v239, %v406
        %v445 = vmul.f32 %v240, %v406
        %v446 = vmul.f32 %v241, %v406
        %v447 = vmul.f32 %v242, %v406
        %v448 = vmul.f32 %v243, %v406
        %v449 = vmul.f32 %v244, %v406
        %v450 = vmul.f32 %v245, %v406
        %v451 = vmul.f32 %v246, %v406
        %v452 = vmul.f32 %v247, %v406
        %v453 = vmul.f32 %v248, %v406
        %v454 = vmul.f32 %v249, %v406
        %v455 = vadd.f32 %v355, %v407
        %v456 = vadd.f32 %v356, %v408
        %v457 = vadd.f32 %v357, %v409
        %v458 = vadd.f32 %v358, %v410
        %v459 = vadd.f32 %v359, %v411
        %v460 = vadd.f32 %v360, %v412
        %v461 = vadd.f32 %v361, %v413
        %v462 = vadd.f32 %v362, %v414
        %v463 = vadd.f32 %v363, %v415
        %v464 = vadd.f32 %v364, %v416
        %v465 = vadd.f32 %v365, %v417
        %v466 = vadd.f32 %v366, %v418
        %v467 = vadd.f32 %v367, %v419
        %v468 = vadd.f32 %v368, %v420
        %v469 = vadd.f32 %v369, %v421
        %v470 = vadd.f32 %v370, %v422
        %v471 = vadd.f32 %v371, %v423
        %v472 = vadd.f32 %v372, %v424
        %v473 = vadd.f32 %v373, %v425
        %v474 = vadd.f32 %v374, %v426
        %v475 = vadd.f32 %v375, %v427
        %v476 = vadd.f32 %v376, %v428
        %v477 = vadd.f32 %v377, %v429
        %v478 = vadd.f32 %v378, %v430
        %v479 = vadd.f32 %v379, %v431
        %v480 = vadd.f32 %v380, %v432
        %v481 = vadd.f32 %v381, %v433
        %v482 = vadd.f32 %v382, %v434
        %v483 = vadd.f32 %v383, %v435
        %v484 = vadd.f32 %v384, %v436
        %v485 = vadd.f32 %v385, %v437
        %v486 = vadd.f32 %v386, %v438
        %v487 = vadd.f32 %v387, %v439
        %v488 = vadd.f32 %v388, %v440
        %v489 = vadd.f32 %v389, %v441
        %v490 = vadd.f32 %v390, %v442
        %v491 = vadd.f32 %v391, %v443
        %v492 = vadd.f32 %v392, %v444
        %v493 = vadd.f32 %v393, %v445
        %v494 = vadd.f32 %v394, %v446
        %v495 = vadd.f32 %v395, %v447
        %v496 = vadd.f32 %v396, %v448
        %v497 = vadd.f32 %v397, %v449
        %v498 = vadd.f32 %v398, %v450
        %v499 = vadd.f32 %v399, %v451
        %v500 = vadd.f32 %v400, %v452
        %v501 = vadd.f32 %v401, %v453
        %v502 = vadd.f32 %v402, %v454
        %v503 = vlaneseq
        %v504 = vshrl.u32 %v503, 7
        %v505 = vsub.s32 3, %v504
        %v506 = vrot.slane %v250, %v505
        %v507 = vmul.f32 %v455, %v506
        %v508 = vmul.f32 %v456, %v506
        %v509 = vmul.f32 %v458, %v506
        %v510 = vmul.f32 %v459, %v506
        %v511 = vmul.f32 %v461, %v506
        %v512 = vmul.f32 %v462, %v506
        %v513 = vmul.f32 %v464, %v506
        %v514 = vmul.f32 %v465, %v506
        %v515 = vmul.f32 %v467, %v506
        %v516 = vmul.f32 %v468, %v506
        %v517 = vmul.f32 %v470, %v506
        %v518 = vmul.f32 %v471, %v506
        %v519 = vmul.f32 %v473, %v506
        %v520 = vmul.f32 %v474, %v506
        %v521 = vmul.f32 %v476, %v506
        %v522 = vmul.f32 %v477, %v506
        %v523 = vmul.f32 %v479, %v506
        %v524 = vmul.f32 %v480, %v506
        %v525 = vmul.f32 %v482, %v506
        %v526 = vmul.f32 %v483, %v506
        %v527 = vmul.f32 %v485, %v506
        %v528 = vmul.f32 %v486, %v506
        %v529 = vmul.f32 %v488, %v506
        %v530 = vmul.f32 %v489, %v506
        %v531 = vmul.f32 %v491, %v506
        %v532 = vmul.f32 %v492, %v506
        %v533 = vmul.f32 %v494, %v506
        %v534 = vmul.f32 %v495, %v506
        %v535 = vmul.f32 %v497, %v506
        %v536 = vmul.f32 %v498, %v506
        %v537 = vmul.f32 %v500, %v506
        %v538 = vmul.f32 %v501, %v506
        %v539 = vlaneseq
        %v540 = vshrl.u32 %v539, 7
        %v541 = vsub.s32 4, %v540
        %v542 = vrot.slane %v250, %v541
        %v543 = vmul.f32 %v455, %v542
        %v544 = vmul.f32 %v456, %v542
        %v545 = vmul.f32 %v457, %v542
        %v546 = vmul.f32 %v458, %v542
        %v547 = vmul.f32 %v459, %v542
        %v548 = vmul.f32 %v460, %v542
        %v549 = vmul.f32 %v461, %v542
        %v550 = vmul.f32 %v462, %v542
        %v551 = vmul.f32 %v463, %v542
        %v552 = vmul.f32 %v464, %v542
        %v553 = vmul.f32 %v465, %v542
        %v554 = vmul.f32 %v466, %v542
        %v555 = vmul.f32 %v467, %v542
        %v556 = vmul.f32 %v468, %v542
        %v557 = vmul.f32 %v469, %v542
        %v558 = vmul.f32 %v470, %v542
        %v559 = vmul.f32 %v471, %v542
        %v560 = vmul.f32 %v472, %v542
        %v561 = vmul.f32 %v473, %v542
        %v562 = vmul.f32 %v474, %v542
        %v563 = vmul.f32 %v475, %v542
        %v564 = vmul.f32 %v476, %v542
        %v565 = vmul.f32 %v477, %v542
        %v566 = vmul.f32 %v478, %v542
        %v567 = vmul.f32 %v479, %v542
        %v568 = vmul.f32 %v480, %v542
        %v569 = vmul.f32 %v481, %v542
        %v570 = vmul.f32 %v482, %v542
        %v571 = vmul.f32 %v483, %v542
        %v572 = vmul.f32 %v484, %v542
        %v573 = vmul.f32 %v485, %v542
        %v574 = vmul.f32 %v486, %v542
        %v575 = vmul.f32 %v487, %v542
        %v576 = vmul.f32 %v488, %v542
        %v577 = vmul.f32 %v489, %v542
        %v578 = vmul.f32 %v490, %v542
        %v579 = vmul.f32 %v491, %v542
        %v580 = vmul.f32 %v492, %v542
        %v581 = vmul.f32 %v493, %v542
        %v582 = vmul.f32 %v494, %v542
        %v583 = vmul.f32 %v495, %v542
        %v584 = vmul.f32 %v496, %v542
        %v585 = vmul.f32 %v497, %v542
        %v586 = vmul.f32 %v498, %v542
        %v587 = vmul.f32 %v499, %v542
        %v588 = vmul.f32 %v500, %v542
        %v589 = vmul.f32 %v501, %v542
        %v590 = vmul.f32 %v502, %v542
        %vm639 = vcmask 1046528
        %v640 = vrot.slane %v543, 1
        %v641 = vrot.slane %v544, 1
        %v642 = vsel %vm639, %v640, %v641
        %v643 = vrot.slane %v545, 1
        %v644 = vsel %vm639, %v641, %v643
        %v645 = vrot.slane %v546, 1
        %v646 = vrot.slane %v547, 1
        %v647 = vsel %vm639, %v645, %v646
        %v648 = vrot.slane %v548, 1
        %v649 = vsel %vm639, %v646, %v648
        %v650 = vrot.slane %v549, 1
        %v651 = vrot.slane %v550, 1
        %v652 = vsel %vm639, %v650, %v651
        %v653 = vrot.slane %v551, 1
        %v654 = vsel %vm639, %v651, %v653
        %v655 = vrot.slane %v552, 1
        %v656 = vrot.slane %v553, 1
        %v657 = vsel %vm639, %v655, %v656
        %v658 = vrot.slane %v554, 1
        %v659 = vsel %vm639, %v656, %v658
        %v660 = vrot.slane %v555, 1
        %v661 = vrot.slane %v556, 1
        %v662 = vsel %vm639, %v660, %v661
        %v663 = vrot.slane %v557, 1
        %v664 = vsel %vm639, %v661, %v663
        %v665 = vrot.slane %v558, 1
        %v666 = vrot.slane %v559, 1
        %v667 = vsel %vm639, %v665, %v666
        %v668 = vrot.slane %v560, 1
        %v669 = vsel %vm639, %v666, %v668
        %v670 = vrot.slane %v561, 1
        %v671 = vrot.slane %v562, 1
        %v672 = vsel %vm639, %v670, %v671
        %v673 = vrot.slane %v563, 1
        %v674 = vsel %vm639, %v671, %v673
        %v675 = vrot.slane %v564, 1
        %v676 = vrot.slane %v565, 1
        %v677 = vsel %vm639, %v675, %v676
        %v678 = vrot.slane %v566, 1
        %v679 = vsel %vm639, %v676, %v678
        %v680 = vrot.slane %v567, 1
        %v681 = vrot.slane %v568, 1
        %v682 = vsel %vm639, %v680, %v681
        %v683 = vrot.slane %v569, 1
        %v684 = vsel %vm639, %v681, %v683
        %v685 = vrot.slane %v570, 1
        %v686 = vrot.slane %v571, 1
        %v687 = vsel %vm639, %v685, %v686
        %v688 = vrot.slane %v572, 1
        %v689 = vsel %vm639, %v686, %v688
        %v690 = vrot.slane %v573, 1
        %v691 = vrot.slane %v574, 1
        %v692 = vsel %vm639, %v690, %v691
        %v693 = vrot.slane %v575, 1
        %v694 = vsel %vm639, %v691, %v693
        %v695 = vrot.slane %v576, 1
        %v696 = vrot.slane %v577, 1
        %v697 = vsel %vm639, %v695, %v696
        %v698 = vrot.slane %v578, 1
        %v699 = vsel %vm639, %v696, %v698
        %v700 = vrot.slane %v579, 1
        %v701 = vrot.slane %v580, 1
        %v702 = vsel %vm639, %v700, %v701
        %v703 = vrot.slane %v581, 1
        %v704 = vsel %vm639, %v701, %v703
        %v705 = vrot.slane %v582, 1
        %v706 = vrot.slane %v583, 1
        %v707 = vsel %vm639, %v705, %v706
        %v708 = vrot.slane %v584, 1
        %v709 = vsel %vm639, %v706, %v708
        %v710 = vrot.slane %v585, 1
        %v711 = vrot.slane %v586, 1
        %v712 = vsel %vm639, %v710, %v711
        %v713 = vrot.slane %v587, 1
        %v714 = vsel %vm639, %v711, %v713
        %v715 = vrot.slane %v588, 1
        %v716 = vrot.slane %v589, 1
        %v717 = vsel %vm639, %v715, %v716
        %v718 = vrot.slane %v590, 1
        %v719 = vsel %vm639, %v716, %v718
        %v752 = vadd.f32 %v507, %v642
        %v753 = vadd.f32 %v508, %v644
        %v754 = vadd.f32 %v509, %v647
        %v755 = vadd.f32 %v510, %v649
        %v756 = vadd.f32 %v511, %v652
        %v757 = vadd.f32 %v512, %v654
        %v758 = vadd.f32 %v513, %v657
        %v759 = vadd.f32 %v514, %v659
        %v760 = vadd.f32 %v515, %v662
        %v761 = vadd.f32 %v516, %v664
        %v762 = vadd.f32 %v517, %v667
        %v763 = vadd.f32 %v518, %v669
        %v764 = vadd.f32 %v519, %v672
        %v765 = vadd.f32 %v520, %v674
        %v766 = vadd.f32 %v521, %v677
        %v767 = vadd.f32 %v522, %v679
        %v768 = vadd.f32 %v523, %v682
        %v769 = vadd.f32 %v524, %v684
        %v770 = vadd.f32 %v525, %v687
        %v771 = vadd.f32 %v526, %v689
        %v772 = vadd.f32 %v527, %v692
        %v773 = vadd.f32 %v528, %v694
        %v774 = vadd.f32 %v529, %v697
        %v775 = vadd.f32 %v530, %v699
        %v776 = vadd.f32 %v531, %v702
        %v777 = vadd.f32 %v532, %v704
        %v778 = vadd.f32 %v533, %v707
        %v779 = vadd.f32 %v534, %v709
        %v780 = vadd.f32 %v535, %v712
        %v781 = vadd.f32 %v536, %v714
        %v782 = vadd.f32 %v537, %v717
        %v783 = vadd.f32 %v538, %v719
        %v784 = vlaneseq
        %v785 = vshrl.u32 %v784, 7
        %v786 = vsub.s32 5, %v785
        %v787 = vrot.slane %v250, %v786
        %v788 = vmul.f32 %v455, %v787
        %v789 = vmul.f32 %v456, %v787
        %v790 = vmul.f32 %v457, %v787
        %v791 = vmul.f32 %v458, %v787
        %v792 = vmul.f32 %v459, %v787
        %v793 = vmul.f32 %v460, %v787
        %v794 = vmul.f32 %v461, %v787
        %v795 = vmul.f32 %v462, %v787
        %v796 = vmul.f32 %v463, %v787
        %v797 = vmul.f32 %v464, %v787
        %v798 = vmul.f32 %v465, %v787
        %v799 = vmul.f32 %v466, %v787
        %v800 = vmul.f32 %v467, %v787
        %v801 = vmul.f32 %v468, %v787
        %v802 = vmul.f32 %v469, %v787
        %v803 = vmul.f32 %v470, %v787
        %v804 = vmul.f32 %v471, %v787
        %v805 = vmul.f32 %v472, %v787
        %v806 = vmul.f32 %v473, %v787
        %v807 = vmul.f32 %v474, %v787
        %v808 = vmul.f32 %v475, %v787
        %v809 = vmul.f32 %v476, %v787
        %v810 = vmul.f32 %v477, %v787
        %v811 = vmul.f32 %v478, %v787
        %v812 = vmul.f32 %v479, %v787
        %v813 = vmul.f32 %v480, %v787
        %v814 = vmul.f32 %v481, %v787
        %v815 = vmul.f32 %v482, %v787
        %v816 = vmul.f32 %v483, %v787
        %v817 = vmul.f32 %v484, %v787
        %v818 = vmul.f32 %v485, %v787
        %v819 = vmul.f32 %v486, %v787
        %v820 = vmul.f32 %v487, %v787
        %v821 = vmul.f32 %v488, %v787
        %v822 = vmul.f32 %v489, %v787
        %v823 = vmul.f32 %v490, %v787
        %v824 = vmul.f32 %v491, %v787
        %v825 = vmul.f32 %v492, %v787
        %v826 = vmul.f32 %v493, %v787
        %v827 = vmul.f32 %v494, %v787
        %v828 = vmul.f32 %v495, %v787
        %v829 = vmul.f32 %v496, %v787
        %v830 = vmul.f32 %v497, %v787
        %v831 = vmul.f32 %v498, %v787
        %v832 = vmul.f32 %v499, %v787
        %v833 = vmul.f32 %v500, %v787
        %v834 = vmul.f32 %v501, %v787
        %v835 = vmul.f32 %v502, %v787
        %vm884 = vcmask 1045504
        %v885 = vrot.slane %v788, 2
        %v886 = vrot.slane %v789, 2
        %v887 = vsel %vm884, %v885, %v886
        %v888 = vrot.slane %v790, 2
        %v889 = vsel %vm884, %v886, %v888
        %v890 = vrot.slane %v791, 2
        %v891 = vrot.slane %v792, 2
        %v892 = vsel %vm884, %v890, %v891
        %v893 = vrot.slane %v793, 2
        %v894 = vsel %vm884, %v891, %v893
        %v895 = vrot.slane %v794, 2
        %v896 = vrot.slane %v795, 2
        %v897 = vsel %vm884, %v895, %v896
        %v898 = vrot.slane %v796, 2
        %v899 = vsel %vm884, %v896, %v898
        %v900 = vrot.slane %v797, 2
        %v901 = vrot.slane %v798, 2
        %v902 = vsel %vm884, %v900, %v901
        %v903 = vrot.slane %v799, 2
        %v904 = vsel %vm884, %v901, %v903
        %v905 = vrot.slane %v800, 2
        %v906 = vrot.slane %v801, 2
        %v907 = vsel %vm884, %v905, %v906
        %v908 = vrot.slane %v802, 2
        %v909 = vsel %vm884, %v906, %v908
        %v910 = vrot.slane %v803, 2
        %v911 = vrot.slane %v804, 2
        %v912 = vsel %vm884, %v910, %v911
        %v913 = vrot.slane %v805, 2
        %v914 = vsel %vm884, %v911, %v913
        %v915 = vrot.slane %v806, 2
        %v916 = vrot.slane %v807, 2
        %v917 = vsel %vm884, %v915, %v916
        %v918 = vrot.slane %v808, 2
        %v919 = vsel %vm884, %v916, %v918
        %v920 = vrot.slane %v809, 2
        %v921 = vrot.slane %v810, 2
        %v922 = vsel %vm884, %v920, %v921
        %v923 = vrot.slane %v811, 2
        %v924 = vsel %vm884, %v921, %v923
        %v925 = vrot.slane %v812, 2
        %v926 = vrot.slane %v813, 2
        %v927 = vsel %vm884, %v925, %v926
        %v928 = vrot.slane %v814, 2
        %v929 = vsel %vm884, %v926, %v928
        %v930 = vrot.slane %v815, 2
        %v931 = vrot.slane %v816, 2
        %v932 = vsel %vm884, %v930, %v931
        %v933 = vrot.slane %v817, 2
        %v934 = vsel %vm884, %v931, %v933
        %v935 = vrot.slane %v818, 2
        %v936 = vrot.slane %v819, 2
        %v937 = vsel %vm884, %v935, %v936
        %v938 = vrot.slane %v820, 2
        %v939 = vsel %vm884, %v936, %v938
        %v940 = vrot.slane %v821, 2
        %v941 = vrot.slane %v822, 2
        %v942 = vsel %vm884, %v940, %v941
        %v943 = vrot.slane %v823, 2
        %v944 = vsel %vm884, %v941, %v943
        %v945 = vrot.slane %v824, 2
        %v946 = vrot.slane %v825, 2
        %v947 = vsel %vm884, %v945, %v946
        %v948 = vrot.slane %v826, 2
        %v949 = vsel %vm884, %v946, %v948
        %v950 = vrot.slane %v827, 2
        %v951 = vrot.slane %v828, 2
        %v952 = vsel %vm884, %v950, %v951
        %v953 = vrot.slane %v829, 2
        %v954 = vsel %vm884, %v951, %v953
        %v955 = vrot.slane %v830, 2
        %v956 = vrot.slane %v831, 2
        %v957 = vsel %vm884, %v955, %v956
        %v958 = vrot.slane %v832, 2
        %v959 = vsel %vm884, %v956, %v958
        %v960 = vrot.slane %v833, 2
        %v961 = vrot.slane %v834, 2
        %v962 = vsel %vm884, %v960, %v961
        %v963 = vrot.slane %v835, 2
        %v964 = vsel %vm884, %v961, %v963
        %v997 = vadd.f32 %v752, %v887
        %v998 = vadd.f32 %v753, %v889
        %v999 = vadd.f32 %v754, %v892
        %v1000 = vadd.f32 %v755, %v894
        %v1001 = vadd.f32 %v756, %v897
        %v1002 = vadd.f32 %v757, %v899
        %v1003 = vadd.f32 %v758, %v902
        %v1004 = vadd.f32 %v759, %v904
        %v1005 = vadd.f32 %v760, %v907
        %v1006 = vadd.f32 %v761, %v909
        %v1007 = vadd.f32 %v762, %v912
        %v1008 = vadd.f32 %v763, %v914
        %v1009 = vadd.f32 %v764, %v917
        %v1010 = vadd.f32 %v765, %v919
        %v1011 = vadd.f32 %v766, %v922
        %v1012 = vadd.f32 %v767, %v924
        %v1013 = vadd.f32 %v768, %v927
        %v1014 = vadd.f32 %v769, %v929
        %v1015 = vadd.f32 %v770, %v932
        %v1016 = vadd.f32 %v771, %v934
        %v1017 = vadd.f32 %v772, %v937
        %v1018 = vadd.f32 %v773, %v939
        %v1019 = vadd.f32 %v774, %v942
        %v1020 = vadd.f32 %v775, %v944
        %v1021 = vadd.f32 %v776, %v947
        %v1022 = vadd.f32 %v777, %v949
        %v1023 = vadd.f32 %v778, %v952
        %v1024 = vadd.f32 %v779, %v954
        %v1025 = vadd.f32 %v780, %v957
        %v1026 = vadd.f32 %v781, %v959
        %v1027 = vadd.f32 %v782, %v962
        %v1028 = vadd.f32 %v783, %v964
        %v1029 = vld [vmem:[%s2] sm:$0xff]
        %v1030 = vld [vmem:[%s3] sm:$0xff]
        %v1031 = vld [vmem:[%s3 + $0x8] sm:$0xff]
        %vm1032 = vcmask 31744
        %v1034 = vsel %vm1032, %v1029, 0
        %v1037 = vsel %vm1032, %v997, 0
        %v1040 = vsel %vm1032, %v998, 0
        %v1043 = vsel %vm1032, %v999, 0
        %v1046 = vsel %vm1032, %v1000, 0
        %v1049 = vsel %vm1032, %v1001, 0
        %v1052 = vsel %vm1032, %v1002, 0
        %v1055 = vsel %vm1032, %v1003, 0
        %v1058 = vsel %vm1032, %v1004, 0
        %v1061 = vsel %vm1032, %v1005, 0
        %v1064 = vsel %vm1032, %v1006, 0
        %v1067 = vsel %vm1032, %v1007, 0
        %v1070 = vsel %vm1032, %v1008, 0
        %v1073 = vsel %vm1032, %v1009, 0
        %v1076 = vsel %vm1032, %v1010, 0
        %v1079 = vsel %vm1032, %v1011, 0
        %v1082 = vsel %vm1032, %v1012, 0
        %v1085 = vsel %vm1032, %v1013, 0
        %v1088 = vsel %vm1032, %v1014, 0
        %v1091 = vsel %vm1032, %v1015, 0
        %v1094 = vsel %vm1032, %v1016, 0
        %v1097 = vsel %vm1032, %v1017, 0
        %v1100 = vsel %vm1032, %v1018, 0
        %v1103 = vsel %vm1032, %v1019, 0
        %v1106 = vsel %vm1032, %v1020, 0
        %v1109 = vsel %vm1032, %v1021, 0
        %v1112 = vsel %vm1032, %v1022, 0
        %v1115 = vsel %vm1032, %v1023, 0
        %v1118 = vsel %vm1032, %v1024, 0
        %v1121 = vsel %vm1032, %v1025, 0
        %v1124 = vsel %vm1032, %v1026, 0
        %v1127 = vsel %vm1032, %v1027, 0
        %v1130 = vsel %vm1032, %v1028, 0
        %1132 = vmatprep.subr.mxu0 0.0
        %1133 = vmatpush1.xpose.msra.mxu0 %v1037
        %1134 = vmatprep.subr.mxu0 0.0
        %1135 = vmatpush1.xpose.msra.mxu0 %v1040
        %1136 = vmatprep.subr.mxu0 0.0
        %1137 = vmatpush1.xpose.msra.mxu0 %v1043
        %1138 = vmatprep.subr.mxu0 0.0
        %1139 = vmatpush1.xpose.msra.mxu0 %v1046
        %1140 = vmatprep.subr.mxu0 0.0
        %1141 = vmatpush1.xpose.msra.mxu0 %v1049
        %1142 = vmatprep.subr.mxu0 0.0
        %1143 = vmatpush1.xpose.msra.mxu0 %v1052
        %1144 = vmatprep.subr.mxu0 0.0
        %1145 = vmatpush1.xpose.msra.mxu0 %v1055
        %1146 = vmatprep.subr.mxu0 0.0
        %1147 = vmatpush1.xpose.msra.mxu0 %v1058
        %1148 = vmatprep.subr.mxu0 0.0
        %1149 = vmatpush1.xpose.msra.mxu0 %v1061
        %1150 = vmatprep.subr.mxu0 0.0
        %1151 = vmatpush1.xpose.msra.mxu0 %v1064
        %1152 = vmatprep.subr.mxu0 0.0
        %1153 = vmatpush1.xpose.msra.mxu0 %v1067
        %1154 = vmatprep.subr.mxu0 0.0
        %1155 = vmatpush1.xpose.msra.mxu0 %v1070
        %1156 = vmatprep.subr.mxu0 0.0
        %1157 = vmatpush1.xpose.msra.mxu0 %v1073
        %1158 = vmatprep.subr.mxu0 0.0
        %1159 = vmatpush1.xpose.msra.mxu0 %v1076
        %1160 = vmatprep.subr.mxu0 0.0
        %1161 = vmatpush1.xpose.msra.mxu0 %v1079
        %1162 = vmatprep.subr.mxu0 0.0
        %1163 = vmatpush1.xpose.msra.mxu0 %v1082
        %1164 = vmatprep.subr.mxu0 0.0
        %1165 = vmatpush1.xpose.msra.mxu0 %v1085
        %1166 = vmatprep.subr.mxu0 0.0
        %1167 = vmatpush1.xpose.msra.mxu0 %v1088
        %1168 = vmatprep.subr.mxu0 0.0
        %1169 = vmatpush1.xpose.msra.mxu0 %v1091
        %1170 = vmatprep.subr.mxu0 0.0
        %1171 = vmatpush1.xpose.msra.mxu0 %v1094
        %1172 = vmatprep.subr.mxu0 0.0
        %1173 = vmatpush1.xpose.msra.mxu0 %v1097
        %1174 = vmatprep.subr.mxu0 0.0
        %1175 = vmatpush1.xpose.msra.mxu0 %v1100
        %1176 = vmatprep.subr.mxu0 0.0
        %1177 = vmatpush1.xpose.msra.mxu0 %v1103
        %1178 = vmatprep.subr.mxu0 0.0
        %1179 = vmatpush1.xpose.msra.mxu0 %v1106
        %1180 = vmatprep.subr.mxu0 0.0
        %1181 = vmatpush1.xpose.msra.mxu0 %v1109
        %1182 = vmatprep.subr.mxu0 0.0
        %1183 = vmatpush1.xpose.msra.mxu0 %v1112
        %1184 = vmatprep.subr.mxu0 0.0
        %1185 = vmatpush1.xpose.msra.mxu0 %v1115
        %1186 = vmatprep.subr.mxu0 0.0
        %1187 = vmatpush1.xpose.msra.mxu0 %v1118
        %1188 = vmatprep.subr.mxu0 0.0
        %1189 = vmatpush1.xpose.msra.mxu0 %v1121
        %1190 = vmatprep.subr.mxu0 0.0
        %1191 = vmatpush1.xpose.msra.mxu0 %v1124
        %1192 = vmatprep.subr.mxu0 0.0
        %1193 = vmatpush1.xpose.msra.mxu0 %v1127
        %1194 = vmatprep.subr.mxu0 0.0
        %1195 = vmatpush1.xpose.msra.mxu0 %v1130
        %1196 = vmatprep.mubr.f32.mxu0 0.0
        %1197 = vmatmul.mubr.f32.gmra.mrb[0].mxu0 %v1034
        %v1198 = vpop.f32.mrb[0].mxu0
        %v1199 = vadd.f32 %v1030, %v1198
        %v1200 = vpop.f32.mrb[0].mxu0
        %v1201 = vadd.f32 %v1031, %v1200
        %1202 = vdwg.mxu0
        %1203 = vst [vmem:[%s190] sm:$0xff] %v1199
        %1204 = vst [vmem:[%s190 + $0x8] sm:$0xff] %v1201
        %s1205 = sand.u32 %s115, 1
        %s1206 = scalar_lea.sflag [#allocation3], %s1205
        %s1207 = sand.u32 %s115, 1
        %s1208 = smul.addr %s1207, 16
        %s1209 = scalar_lea.vmem [#allocation2], %s1208
        // Predicated region
        $region37: #{tpu_custom_call.1} parent=35 // pred_check
          %p1210 = pneg %p125
        $region38: #{tpu_custom_call.1} parent=35 // pred_check_branch
          %1212 = sbr.rel (%p1210) target = $region40
        $region39: #{tpu_custom_call.1} parent=35 // pred_region
          %s1214 = ssub.s32 256, 256
          %1215 = vsyncadd %s1206, %s1214
          %s1216 = smul.addr %s18, 2
          %s1217 = smul.addr %s1216, 128
          %s1218 = scalar_lea.hbm %s4, %s1217
          %s1220 = sshll.u32 %s1209, 4
          %s1221 = int_to_ptr.vmem [resolvable:$true] %s1220
          %1223 = dma.vmem_to_hbm [thread:$0]  %s1221, 256, %s1218, %s1206
        $region40: #{tpu_custom_call.1} parent=35 // pred_fallthru
          _
      $region36: #{tpu_custom_call.1} parent=5 // pred_fallthru
        _
      %p1224 = scmp.le.s32.totalorder 2, %s13
      // Predicated region
      $region41: #{tpu_custom_call.1} parent=5 // pred_check
        %p1225 = pneg %p1224
      $region42: #{tpu_custom_call.1} parent=5 // pred_check_branch
        %1227 = sbr.rel (%p1225) target = $region44
      $region43: #{tpu_custom_call.1} parent=5 // pred_region
        %s1228 = ssub.s32 %s13, 2
        // Predicated region
        $region45: #{tpu_custom_call.1} parent=43 // pred_check
          %p1229 = pneg %p131
        $region46: #{tpu_custom_call.1} parent=43 // pred_check_branch
          %1231 = sbr.rel (%p1229) target = $region48
        $region47: #{tpu_custom_call.1} parent=43 // pred_region
          %s1232 = sand.u32 %s116, 1
          %s1233 = scalar_lea.sflag [#allocation3], %s1232
          %s1234 = sand.u32 %s116, 1
          %s1235 = smul.addr %s1234, 16
          %s1236 = scalar_lea.vmem [#allocation2], %s1235
          %1237 = dma.done %s1233, 256
        $region48: #{tpu_custom_call.1} parent=43 // pred_fallthru
          _
      $region44: #{tpu_custom_call.1} parent=5 // pred_fallthru
        _
    $region6: #{tpu_custom_call.1} parent=1 // loop_footer
      %s17 = sadd.s32 1, %s13
    $region7: #{tpu_custom_call.1} parent=1 // loop_footer_branch
      %12 = sbr.rel target = $region3
    $region8: #{tpu_custom_call.1} parent=1 // loop_exit
      _
    %1238 = vsyncpa [#allocation3], 1
    %s1239 = scalar_lea.sflag [#allocation3], 1
    %1240 = vsyncpa %s1239, 1

</llo_original>
